<compile_context>
chip_gen: v7x
topology: tpu7x:2x2x1
jax: 0.10.0
libtpu: 0.0.40
codegen_flags: <defaults>
</compile_context>

<pallas_src>
import functools

import jax
import jax.numpy as jnp
from jax.experimental import pallas as pl
from jax.experimental.pallas import tpu as pltpu


_LANE = 128          # vreg lane width
_SUBLANE = 8         # vreg sublane count
_TM_MAX = 256        # rows of M per grid step
_VMEM_LIMIT = 32 * 1024 * 1024


def _round_up(x, m):
    return (x + m - 1) // m * m


# ----------------------------------------------------------------------------
# Pallas kernels
# ----------------------------------------------------------------------------
def _conv_bn_act_kernel(p_ref, w_ref, scale_ref, bias_ref, o_ref, *, relu):
    """im2col matmul (MXU, bf16 in / f32 acc) fused with folded-BN affine + ReLU."""
    acc = jnp.dot(p_ref[...], w_ref[...], preferred_element_type=jnp.float32)
    out = acc * scale_ref[...] + bias_ref[...]
    if relu:
        out = jnp.maximum(out, 0.0)
    o_ref[...] = out


def _conv_bn_res_act_kernel(p_ref, w_ref, scale_ref, bias_ref, res_ref, o_ref,
                            *, relu):
    """Same as above, plus a residual add (only instantiated when needed)."""
    acc = jnp.dot(p_ref[...], w_ref[...], preferred_element_type=jnp.float32)
    out = acc * scale_ref[...] + bias_ref[...] + res_ref[...]
    if relu:
        out = jnp.maximum(out, 0.0)
    o_ref[...] = out


def _maxpool_kernel(p_ref, o_ref):
    """p_ref: (KK, TM, C) stacked window taps; elementwise max over the tap axis."""
    o_ref[...] = jnp.max(p_ref[...], axis=0)


# ----------------------------------------------------------------------------
# Wrappers (im2col / pad / reshape glue in plain JAX, compute in Pallas)
# ----------------------------------------------------------------------------
def _im2col(x, kh, kw, stride, pad):
    """x: NHWC -> patches [N*OH*OW, KH*KW*C] (column order = (kh, kw, cin))."""
    n, h, w, c = x.shape
    xp = jnp.pad(x, ((0, 0), (pad, pad), (pad, pad), (0, 0)))
    oh = (h + 2 * pad - kh) // stride + 1
    ow = (w + 2 * pad - kw) // stride + 1
    cols = []
    for i in range(kh):
        for j in range(kw):
            cols.append(xp[:, i:i + stride * oh:stride, j:j + stride * ow:stride, :])
    patches = jnp.stack(cols, axis=3)  # (N, OH, OW, KH*KW, C)
    return patches.reshape(n * oh * ow, kh * kw * c), oh, ow


def _row_tiling(m):
    """Pick a sublane-aligned row tile and the padded M it evenly divides."""
    mp = _round_up(m, _SUBLANE)
    tm = mp if mp <= _TM_MAX else _TM_MAX
    mp = _round_up(mp, tm)
    return mp, tm


def conv_bn_act(x, w, scale, bias, *, stride, pad, residual=None, relu=True):
    """x: NHWC f32, w: (KH, KW, Cin, Cout).  Returns NHWC f32."""
    n = x.shape[0]
    kh, kw, cin, cout = w.shape
    patches, oh, ow = _im2col(x, kh, kw, stride, pad)
    m, k = patches.shape

    # Lane/sublane alignment: K and Cout padded to multiples of 128 so the MXU
    # N dim is lane-dense and stores are unmasked; M padded to the row tile.
    kp = _round_up(k, _LANE)
    coutp = _round_up(cout, _LANE)
    mp, tm = _row_tiling(m)

    patches_p = jnp.zeros((mp, kp), jnp.bfloat16).at[:m, :k].set(
        patches.astype(jnp.bfloat16))
    w_p = jnp.zeros((kp, coutp), jnp.bfloat16).at[:k, :cout].set(
        w.reshape(k, cout).astype(jnp.bfloat16))
    scale_p = jnp.zeros((1, coutp), jnp.float32).at[:, :cout].set(
        scale.reshape(1, cout))
    bias_p = jnp.zeros((1, coutp), jnp.float32).at[:, :cout].set(
        bias.reshape(1, cout))

    grid = (mp // tm,)
    row_in_spec = pl.BlockSpec((tm, kp), lambda i: (i, 0))
    w_spec = pl.BlockSpec((kp, coutp), lambda i: (0, 0))      # VMEM-resident
    vec_spec = pl.BlockSpec((1, coutp), lambda i: (0, 0))     # VMEM-resident
    row_out_spec = pl.BlockSpec((tm, coutp), lambda i: (i, 0))

    compiler_params = pltpu.CompilerParams(
        dimension_semantics=("parallel",),
        vmem_limit_bytes=_VMEM_LIMIT,
    )

    if residual is None:
        out = pl.pallas_call(
            functools.partial(_conv_bn_act_kernel, relu=relu),
            out_shape=jax.ShapeDtypeStruct((mp, coutp), jnp.float32),
            grid=grid,
            in_specs=[row_in_spec, w_spec, vec_spec, vec_spec],
            out_specs=row_out_spec,
            compiler_params=compiler_params,
        )(patches_p, w_p, scale_p, bias_p)
    else:
        res_p = jnp.zeros((mp, coutp), jnp.float32).at[:m, :cout].set(
            residual.reshape(m, cout))
        out = pl.pallas_call(
            functools.partial(_conv_bn_res_act_kernel, relu=relu),
            out_shape=jax.ShapeDtypeStruct((mp, coutp), jnp.float32),
            grid=grid,
            in_specs=[row_in_spec, w_spec, vec_spec, vec_spec,
                      pl.BlockSpec((tm, coutp), lambda i: (i, 0))],
            out_specs=row_out_spec,
            compiler_params=compiler_params,
        )(patches_p, w_p, scale_p, bias_p, res_p)

    return out[:m, :cout].reshape(n, oh, ow, cout)


def maxpool_3x3_s2_p1(x):
    """MaxPool2d(kernel=3, stride=2, padding=1), NHWC in/out."""
    n, h, w, c = x.shape
    k, s, pad = 3, 2, 1
    xp = jnp.pad(x, ((0, 0), (pad, pad), (pad, pad), (0, 0)),
                 constant_values=-jnp.inf)
    oh = (h + 2 * pad - k) // s + 1
    ow = (w + 2 * pad - k) // s + 1
    m = n * oh * ow
    views = [xp[:, i:i + s * oh:s, j:j + s * ow:s, :].reshape(m, c)
             for i in range(k) for j in range(k)]
    p = jnp.stack(views, axis=0)  # (9, M, C)

    mp, tm = _row_tiling(m)
    if mp != m:
        p = jnp.pad(p, ((0, 0), (0, mp - m), (0, 0)), constant_values=-jnp.inf)

    out = pl.pallas_call(
        _maxpool_kernel,
        out_shape=jax.ShapeDtypeStruct((mp, c), jnp.float32),
        grid=(mp // tm,),
        in_specs=[pl.BlockSpec((k * k, tm, c), lambda i: (0, i, 0))],
        out_specs=pl.BlockSpec((tm, c), lambda i: (i, 0)),
        compiler_params=pltpu.CompilerParams(
            dimension_semantics=("parallel",),
            vmem_limit_bytes=_VMEM_LIMIT),
    )(p)
    return out[:m].reshape(n, oh, ow, c)


# ----------------------------------------------------------------------------
# Parameters (deterministic synthetic init; BN folded into scale/bias, eval mode)
# ----------------------------------------------------------------------------
def _fold_bn(gamma, beta, mean, var, eps=1e-5):
    scale = gamma / jnp.sqrt(var + eps)
    bias = beta - mean * scale
    return scale, bias


def _init_conv_bn(key, kh, kw, cin, cout):
    k1, k2, k3, k4, k5 = jax.random.split(key, 5)
    w = 0.1 * jax.random.normal(k1, (kh, kw, cin, cout), jnp.float32)
    gamma = 1.0 + 0.1 * jax.random.normal(k2, (cout,), jnp.float32)
    beta = 0.1 * jax.random.normal(k3, (cout,), jnp.float32)
    mean = 0.1 * jax.random.normal(k4, (cout,), jnp.float32)
    var = jnp.abs(jax.random.normal(k5, (cout,), jnp.float32)) + 0.5
    scale, bias = _fold_bn(gamma, beta, mean, var)
    return {"w": w, "scale": scale, "bias": bias}


def init_resnet_bottom_params(key):
    keys = jax.random.split(key, 16)
    params = {"stem": _init_conv_bn(keys[0], 7, 7, 3, 8)}
    stages = [(8, 8, 1), (8, 16, 2), (16, 32, 2), (32, 64, 2)]  # (cin, cout, stride)
    layers = []
    ki = 1
    for cin, cout, stride in stages:
        blk = {
            "conv1": _init_conv_bn(keys[ki], 3, 3, cin, cout),
            "conv2": _init_conv_bn(keys[ki + 1], 3, 3, cout, cout),
        }
        ki += 2
        if stride != 1 or cin != cout:
            blk["down"] = _init_conv_bn(keys[ki], 1, 1, cin, cout)
            ki += 1
        layers.append((blk, stride))
    params["layers"] = layers
    return params


# ----------------------------------------------------------------------------
# Forward (ResNetBottom.forward semantics: features(x), print shape, return)
# ----------------------------------------------------------------------------
def basic_block(x, blk, stride):
    if "down" in blk:
        identity = conv_bn_act(x, blk["down"]["w"], blk["down"]["scale"],
                               blk["down"]["bias"], stride=stride, pad=0, relu=False)
    else:
        identity = x
    out = conv_bn_act(x, blk["conv1"]["w"], blk["conv1"]["scale"],
                      blk["conv1"]["bias"], stride=stride, pad=1, relu=True)
    out = conv_bn_act(out, blk["conv2"]["w"], blk["conv2"]["scale"],
                      blk["conv2"]["bias"], stride=1, pad=1,
                      residual=identity, relu=True)
    return out


def resnet_bottom_forward(params, x_nchw):
    x = jnp.transpose(x_nchw, (0, 2, 3, 1))  # NCHW -> NHWC
    x = conv_bn_act(x, params["stem"]["w"], params["stem"]["scale"],
                    params["stem"]["bias"], stride=2, pad=3, relu=True)
    x = maxpool_3x3_s2_p1(x)
    for blk, stride in params["layers"]:
        x = basic_block(x, blk, stride)
    return jnp.transpose(x, (0, 3, 1, 2))  # feature map back to NCHW


if __name__ == "__main__":
    key = jax.random.PRNGKey(0)
    kp_, kx = jax.random.split(key)
    params = init_resnet_bottom_params(kp_)

    x = jax.random.normal(kx, (2, 3, 32, 32), jnp.float32)  # NCHW, like PyTorch
    feat = resnet_bottom_forward(params, x)
    feat = jax.block_until_ready(feat)

    # matches ResNetBottom.forward's print of the feature map shape
    print("Feature Map shape:")
    print(feat.shape)
    print("KERNEL_OK")
</pallas_src>

<mosaic_0001>
module attributes {stable_mosaic.version = 11 : i64} {
  func.func @_conv_bn_act_kernel(%arg0: i32, %arg1: memref<256x256xbf16, #tpu.memory_space<vmem>>, %arg2: memref<256x128xbf16, #tpu.memory_space<vmem>>, %arg3: memref<1x128xf32, #tpu.memory_space<vmem>>, %arg4: memref<1x128xf32, #tpu.memory_space<vmem>>, %arg5: memref<256x128xf32, #tpu.memory_space<vmem>>) attributes {dimension_semantics = [#tpu.dimension_semantics<parallel>], iteration_bounds = array<i64: 2>, scalar_prefetch = 0 : i64, scratch_operands = 0 : i64, tpu.core_type = #tpu.core_type<tc>, window_params = [{transform_indices = @transform_0, window_bounds = array<i64: 256, 256>}, {pipeline_mode = #tpu.pipeline_mode<synchronous>, transform_indices = @transform_1, window_bounds = array<i64: 256, 128>}, {pipeline_mode = #tpu.pipeline_mode<synchronous>, transform_indices = @transform_2, window_bounds = array<i64: 1, 128>}, {pipeline_mode = #tpu.pipeline_mode<synchronous>, transform_indices = @transform_3, window_bounds = array<i64: 1, 128>}, {transform_indices = @transform_4, window_bounds = array<i64: 256, 128>}]} {
    %c0 = arith.constant 0 : index
    %c0_0 = arith.constant 0 : index
    %0 = vector.load %arg1[%c0, %c0_0] : memref<256x256xbf16, #tpu.memory_space<vmem>>, vector<256x256xbf16>
    %c0_1 = arith.constant 0 : index
    %c0_2 = arith.constant 0 : index
    %1 = vector.load %arg2[%c0_1, %c0_2] : memref<256x128xbf16, #tpu.memory_space<vmem>>, vector<256x128xbf16>
    %cst = arith.constant dense<0.000000e+00> : vector<256x128xf32>
    %2 = tpu.matmul %0, %1, %cst {dimension_numbers = #tpu.dot_dimension_numbers<[1], [0], [0], [1], [0, 0, 1, 1], [], []>} : vector<256x256xbf16>, vector<256x128xbf16>, vector<256x128xf32> -> vector<256x128xf32>
    %c0_3 = arith.constant 0 : index
    %c0_4 = arith.constant 0 : index
    %3 = vector.load %arg3[%c0_3, %c0_4] : memref<1x128xf32, #tpu.memory_space<vmem>>, vector<1x128xf32>
    %4 = vector.broadcast %3 : vector<1x128xf32> to vector<256x128xf32>
    %5 = arith.mulf %2, %4 : vector<256x128xf32>
    %c0_5 = arith.constant 0 : index
    %c0_6 = arith.constant 0 : index
    %6 = vector.load %arg4[%c0_5, %c0_6] : memref<1x128xf32, #tpu.memory_space<vmem>>, vector<1x128xf32>
    %7 = vector.broadcast %6 : vector<1x128xf32> to vector<256x128xf32>
    %8 = arith.addf %5, %7 : vector<256x128xf32>
    %cst_7 = arith.constant 0.000000e+00 : f32
    %9 = vector.broadcast %cst_7 : f32 to vector<256x128xf32>
    %10 = arith.maximumf %8, %9 : vector<256x128xf32>
    %c0_8 = arith.constant 0 : index
    %c0_9 = arith.constant 0 : index
    %11 = vector.load %arg5[%c0_8, %c0_9] : memref<256x128xf32, #tpu.memory_space<vmem>>, vector<256x128xf32>
    tpu.vector_store %arg5[%c0_8, %c0_9], %10 {strides = array<i32>} : memref<256x128xf32, #tpu.memory_space<vmem>>, vector<256x128xf32>,
    return
  }
  func.func @transform_0(%arg0: i32) -> (i32, i32) {
    %c0_i32 = arith.constant 0 : i32
    %c0_i32_0 = arith.constant 0 : i32
    return %arg0, %c0_i32 : i32, i32
  }
  func.func @transform_1(%arg0: i32) -> (i32, i32) {
    %c0_i32 = arith.constant 0 : i32
    %c0_i32_0 = arith.constant 0 : i32
    %c0_i32_1 = arith.constant 0 : i32
    return %c0_i32, %c0_i32_0 : i32, i32
  }
  func.func @transform_2(%arg0: i32) -> (i32, i32) {
    %c0_i32 = arith.constant 0 : i32
    %c0_i32_0 = arith.constant 0 : i32
    %c0_i32_1 = arith.constant 0 : i32
    return %c0_i32, %c0_i32_0 : i32, i32
  }
  func.func @transform_3(%arg0: i32) -> (i32, i32) {
    %c0_i32 = arith.constant 0 : i32
    %c0_i32_0 = arith.constant 0 : i32
    %c0_i32_1 = arith.constant 0 : i32
    return %c0_i32, %c0_i32_0 : i32, i32
  }
  func.func @transform_4(%arg0: i32) -> (i32, i32) {
    %c0_i32 = arith.constant 0 : i32
    %c0_i32_0 = arith.constant 0 : i32
    return %arg0, %c0_i32 : i32, i32
  }
}

</mosaic_0001>

<llo_original>
// kernel: tpu_custom_call.1
$region0: #{tpu_custom_call.1}
  #allocation0 [shape = 'u32[]', space=smem, size = 0x4, offset = 0x4, fixed_abs, tag = 'smem constant byte address 0x4 - core index']
  #allocation1 [shape = 'u32[144,128]{1,0:T(1,128)}', space=vmem, size = 0x12000, scoped, tag = 'internal scratch']
  %s0 = inlined_call_operand.hbm [shape: bf16[512,256], index: 0, kind: input, shape index: {}]
  %s1 = inlined_call_operand.hbm [shape: bf16[256,128], index: 1, kind: input, shape index: {}]
  %s2 = inlined_call_operand.vmem [shape: f32[1,128], index: 2, kind: input, shape index: {}]
  %s3 = inlined_call_operand.vmem [shape: f32[1,128], index: 3, kind: input, shape index: {}]
  %s4 = inlined_call_operand.hbm [shape: f32[512,128], index: 4, kind: output, shape index: {}]
  %s5 = sld [smem:[#allocation0]]
  $region57: #{tpu_custom_call.1} parent=0
    _
  %s7 = ssub.s32 1, %s5
  %s8 = scalar_select 0, %s7, %s5
  $region1: #{tpu_custom_call.1} parent=0
    #allocation2 [shape = 'u8[262144]{0}', space=vmem, size = 0x40000, scoped, tag = 'input window, operand 0']
    #allocation3 [shape = 's32[2]{0}', space=sflag, size = 0x8, scoped, tag = 'scoped memory for tpu_custom_call.1']
    #allocation4 [shape = 's32[2]{0}', space=sflag, size = 0x8, scoped, tag = 'scoped memory for tpu_custom_call.1']
    #allocation5 [shape = 'u8[65536]{0}', space=vmem, size = 0x10000, scoped, tag = 'input window, operand 1, single buffered']
    #allocation6 [shape = 's32[1]{0}', space=sflag, size = 0x4, scoped, tag = 'scoped memory for tpu_custom_call.1']
    #allocation7 [shape = 'u8[262144]{0}', space=vmem, size = 0x40000, scoped, tag = 'output window, operand 0']
    %9 = vsyncpa [#allocation3], 0
    %s10 = scalar_lea.sflag [#allocation3], 1
    %11 = vsyncpa %s10, 0
    %12 = vsyncpa [#allocation6], 0
    %13 = vsyncpa [#allocation4], 0
    %s14 = scalar_lea.sflag [#allocation4], 1
    %15 = vsyncpa %s14, 0
    loop: start=0, step=1, limit=4
    $region2: #{tpu_custom_call.1} parent=1 // loop_pre_header
      _
    $region3: #{tpu_custom_call.1} parent=1 // loop_header
      %s17 = sphi 0, %s21
      %p18 = scmp.ge.s32.totalorder %s17, 4
      %s27 = sphi 0, %s29
      %s30 = sphi 0, %s27
      %s31 = sphi 0, %s30
      %s47 = sphi 0, %s31
      %s51 = sphi 0, %s51
      %s53 = sphi 0, %s51
      %s54 = sphi 0, %s53
      %s68 = sphi 0, %s54
      %s72 = sphi 0, %s72
      %s74 = sphi 0, %s72
      %s75 = sphi 0, %s74
      %s89 = sphi 0, %s75
      %s93 = sphi 0, %s93
      %s95 = sphi 0, %s93
      %s96 = sphi 0, %s95
      %s110 = sphi 0, %s96
      %s116 = sphi 0, %s118
      %s119 = sphi 0, %s116
      %s120 = sphi 0, %s119
      %s136 = sphi 0, %s120
    $region4: #{tpu_custom_call.1} parent=1 // loop_header_branch
      %20 = sbr.rel (%p18) target = $region8
    $region5: #{tpu_custom_call.1} parent=1 // loop_body
      %s22 = ssub.s32 %s17, 1
      %s23 = ssub.s32 %s17, 2
      %s24 = sadd.s32 %s17, 1
      %s25 = ssub.s32 %s17, %s24
      %p26 = scmp.eq.s32.totalorder %s25, 0
      %s28 = sadd.s32 %s27, 1
      %s29 = scalar_select %p26, %s27, %s28
      %p32 = pneg %p26
      %p33 = scmp.eq.s32.totalorder %s17, 1
      %p34 = por %p32, %p33
      %p35 = scmp.ne.s32.totalorder %s27, %s30
      %p36 = scmp.eq.s32.totalorder %s17, 0
      %p37 = por %p35, %p36
      %p38 = scmp.ne.s32.totalorder %s27, %s30
      %p39 = scmp.eq.s32.totalorder %s22, 1
      %p40 = por %p38, %p39
      %p41 = scmp.ne.s32.totalorder %s30, %s31
      %p42 = scmp.eq.s32.totalorder %s22, 0
      %p43 = por %p41, %p42
      %p44 = scmp.ne.s32.totalorder %s30, %s31
      %p45 = scmp.eq.s32.totalorder %s23, 1
      %p46 = por %p44, %p45
      %p48 = scmp.ne.s32.totalorder %s31, %s47
      %p49 = scmp.eq.s32.totalorder %s23, 0
      %p50 = por %p48, %p49
      %s52 = sadd.s32 %s51, 1
      %p55 = scmp.eq.s32.totalorder %s17, 1
      %p56 = scmp.ne.s32.totalorder %s51, %s53
      %p57 = scmp.eq.s32.totalorder %s17, 0
      %p58 = por %p56, %p57
      %p59 = scmp.ne.s32.totalorder %s51, %s53
      %p60 = scmp.eq.s32.totalorder %s22, 1
      %p61 = por %p59, %p60
      %p62 = scmp.ne.s32.totalorder %s53, %s54
      %p63 = scmp.eq.s32.totalorder %s22, 0
      %p64 = por %p62, %p63
      %p65 = scmp.ne.s32.totalorder %s53, %s54
      %p66 = scmp.eq.s32.totalorder %s23, 1
      %p67 = por %p65, %p66
      %p69 = scmp.ne.s32.totalorder %s54, %s68
      %p70 = scmp.eq.s32.totalorder %s23, 0
      %p71 = por %p69, %p70
      %s73 = sadd.s32 %s72, 1
      %p76 = scmp.eq.s32.totalorder %s17, 1
      %p77 = scmp.ne.s32.totalorder %s72, %s74
      %p78 = scmp.eq.s32.totalorder %s17, 0
      %p79 = por %p77, %p78
      %p80 = scmp.ne.s32.totalorder %s72, %s74
      %p81 = scmp.eq.s32.totalorder %s22, 1
      %p82 = por %p80, %p81
      %p83 = scmp.ne.s32.totalorder %s74, %s75
      %p84 = scmp.eq.s32.totalorder %s22, 0
      %p85 = por %p83, %p84
      %p86 = scmp.ne.s32.totalorder %s74, %s75
      %p87 = scmp.eq.s32.totalorder %s23, 1
      %p88 = por %p86, %p87
      %p90 = scmp.ne.s32.totalorder %s75, %s89
      %p91 = scmp.eq.s32.totalorder %s23, 0
      %p92 = por %p90, %p91
      %s94 = sadd.s32 %s93, 1
      %p97 = scmp.eq.s32.totalorder %s17, 1
      %p98 = scmp.ne.s32.totalorder %s93, %s95
      %p99 = scmp.eq.s32.totalorder %s17, 0
      %p100 = por %p98, %p99
      %p101 = scmp.ne.s32.totalorder %s93, %s95
      %p102 = scmp.eq.s32.totalorder %s22, 1
      %p103 = por %p101, %p102
      %p104 = scmp.ne.s32.totalorder %s95, %s96
      %p105 = scmp.eq.s32.totalorder %s22, 0
      %p106 = por %p104, %p105
      %p107 = scmp.ne.s32.totalorder %s95, %s96
      %p108 = scmp.eq.s32.totalorder %s23, 1
      %p109 = por %p107, %p108
      %p111 = scmp.ne.s32.totalorder %s96, %s110
      %p112 = scmp.eq.s32.totalorder %s23, 0
      %p113 = por %p111, %p112
      %s114 = ssub.s32 %s17, %s24
      %p115 = scmp.eq.s32.totalorder %s114, 0
      %s117 = sadd.s32 %s116, 1
      %s118 = scalar_select %p115, %s116, %s117
      %p121 = pneg %p115
      %p122 = scmp.eq.s32.totalorder %s17, 1
      %p123 = por %p121, %p122
      %p124 = scmp.ne.s32.totalorder %s116, %s119
      %p125 = scmp.eq.s32.totalorder %s17, 0
      %p126 = por %p124, %p125
      %p127 = scmp.ne.s32.totalorder %s116, %s119
      %p128 = scmp.eq.s32.totalorder %s22, 1
      %p129 = por %p127, %p128
      %p130 = scmp.ne.s32.totalorder %s119, %s120
      %p131 = scmp.eq.s32.totalorder %s22, 0
      %p132 = por %p130, %p131
      %p133 = scmp.ne.s32.totalorder %s119, %s120
      %p134 = scmp.eq.s32.totalorder %s23, 1
      %p135 = por %p133, %p134
      %p137 = scmp.ne.s32.totalorder %s120, %s136
      %p138 = scmp.eq.s32.totalorder %s23, 0
      %p139 = por %p137, %p138
      %p140 = scmp.le.s32.totalorder 1, %s17
      %p141 = scmp.lt.s32.totalorder %s17, 3
      %p142 = pnand %p140, %p141
      %p143 = pneg %p142
      // Predicated region
      $region9: #{tpu_custom_call.1} parent=5 // pred_check
        _
      $region10: #{tpu_custom_call.1} parent=5 // pred_check_branch
        %145 = sbr.rel (%p142) target = $region12
      $region11: #{tpu_custom_call.1} parent=5 // pred_region
        %s146 = ssub.s32 %s17, 1
        // Predicated region
        $region13: #{tpu_custom_call.1} parent=11 // pred_check
          %p147 = pneg %p64
        $region14: #{tpu_custom_call.1} parent=11 // pred_check_branch
          %149 = sbr.rel (%p147) target = $region16
        $region15: #{tpu_custom_call.1} parent=11 // pred_region
          %s151 = ssub.s32 2048, 2048
          %152 = vsyncadd [#allocation6], %s151
          %s153 = sshll.u32 [#allocation5], 4
          %s154 = int_to_ptr.vmem [resolvable:$true] %s153
          %159 = dma.hbm_to_vmem [thread:$0]  %s1, 2048, %s154, [#allocation6], 64, 64, 4
        $region16: #{tpu_custom_call.1} parent=11 // pred_fallthru
          _
        // Predicated region
        $region17: #{tpu_custom_call.1} parent=11 // pred_check
          %p160 = pneg %p85
        $region18: #{tpu_custom_call.1} parent=11 // pred_check_branch
          %162 = sbr.rel (%p160) target = $region20
        $region19: #{tpu_custom_call.1} parent=11 // pred_region
          _
        $region20: #{tpu_custom_call.1} parent=11 // pred_fallthru
          _
        // Predicated region
        $region21: #{tpu_custom_call.1} parent=11 // pred_check
          %p163 = pneg %p106
        $region22: #{tpu_custom_call.1} parent=11 // pred_check_branch
          %165 = sbr.rel (%p163) target = $region24
        $region23: #{tpu_custom_call.1} parent=11 // pred_region
          _
        $region24: #{tpu_custom_call.1} parent=11 // pred_fallthru
          _
      $region12: #{tpu_custom_call.1} parent=5 // pred_fallthru
        _
      %p166 = scmp.lt.s32.totalorder %s17, 2
      // Predicated region
      $region25: #{tpu_custom_call.1} parent=5 // pred_check
        %p167 = pneg %p166
      $region26: #{tpu_custom_call.1} parent=5 // pred_check_branch
        %169 = sbr.rel (%p167) target = $region28
      $region27: #{tpu_custom_call.1} parent=5 // pred_region
        // Predicated region
        $region29: #{tpu_custom_call.1} parent=27 // pred_check
          %p170 = pneg %p37
        $region30: #{tpu_custom_call.1} parent=27 // pred_check_branch
          %172 = sbr.rel (%p170) target = $region32
        $region31: #{tpu_custom_call.1} parent=27 // pred_region
          %s173 = sand.u32 %s27, 1
          %s174 = scalar_lea.sflag [#allocation3], %s173
          %s175 = sand.u32 %s27, 1
          %s176 = smul.addr %s175, 256
          %s177 = scalar_lea.vmem [#allocation2], %s176
          %s178 = smul.u32 32, %s17
          %s180 = ssub.s32 4096, 4096
          %181 = vsyncadd %s174, %s180
          %s182 = smul.addr %s178, 2
          %s183 = smul.addr %s182, 64
          %s184 = scalar_lea.hbm %s0, %s183
          %s185 = sshll.u32 %s177, 4
          %s186 = int_to_ptr.vmem [resolvable:$true] %s185
          %191 = dma.hbm_to_vmem [thread:$0]  %s184, 4096, %s186, %s174, 128, 128, 8
        $region32: #{tpu_custom_call.1} parent=27 // pred_fallthru
          _
      $region28: #{tpu_custom_call.1} parent=5 // pred_fallthru
        _
      %p192 = scmp.le.s32.totalorder 1, %s17
      %p193 = scmp.lt.s32.totalorder %s17, 3
      %p194 = pnand %p192, %p193
      %p195 = pneg %p194
      // Predicated region
      $region33: #{tpu_custom_call.1} parent=5 // pred_check
        _
      $region34: #{tpu_custom_call.1} parent=5 // pred_check_branch
        %197 = sbr.rel (%p194) target = $region36
      $region35: #{tpu_custom_call.1} parent=5 // pred_region
        %s198 = ssub.s32 %s17, 1
        %s199 = sand.u32 %s30, 1
        %s200 = scalar_lea.sflag [#allocation3], %s199
        %s201 = sand.u32 %s30, 1
        %s202 = smul.addr %s201, 256
        %s203 = scalar_lea.vmem [#allocation2], %s202
        // Predicated region
        $region37: #{tpu_custom_call.1} parent=35 // pred_check
          %p204 = pneg %p43
        $region38: #{tpu_custom_call.1} parent=35 // pred_check_branch
          %206 = sbr.rel (%p204) target = $region40
        $region39: #{tpu_custom_call.1} parent=35 // pred_region
          %207 = dma.done %s200, 4096
        $region40: #{tpu_custom_call.1} parent=35 // pred_fallthru
          _
        // Predicated region
        $region41: #{tpu_custom_call.1} parent=35 // pred_check
          %p208 = pneg %p64
        $region42: #{tpu_custom_call.1} parent=35 // pred_check_branch
          %210 = sbr.rel (%p208) target = $region44
        $region43: #{tpu_custom_call.1} parent=35 // pred_region
          %211 = dma.done [#allocation6], 2048
        $region44: #{tpu_custom_call.1} parent=35 // pred_fallthru
          _
        %s212 = sand.u32 %s30, 1
        %s213 = scalar_lea.sflag [#allocation3], %s212
        %s214 = sand.u32 %s30, 1
        %s215 = smul.addr %s214, 256
        %s216 = scalar_lea.vmem [#allocation2], %s215
        %p217 = pneg %p43
        %p218 = pneg %p40
        %p219 = pneg %p64
        %p220 = pneg %p61
        %p221 = pneg %p85
        %p222 = pneg %p82
        %p223 = pneg %p106
        %p224 = pneg %p103
        %p225 = pneg %p132
        %p226 = pneg %p129
        %s227 = sand.u32 %s119, 1
        %s228 = scalar_lea.sflag [#allocation4], %s227
        %s229 = sand.u32 %s119, 1
        %s230 = smul.addr %s229, 256
        %s231 = scalar_lea.vmem [#allocation7], %s230
        %s232 = smul.u32 32, %s22
        %s233 = smul.u32 32, %s22
        %v235 = vld [vmem:[%s203] sm:$0xff]
        %v236 = vld [vmem:[%s203 + $0x8] sm:$0xff]
        %v237 = vld [vmem:[%s203 + $0x10] sm:$0xff]
        %v238 = vld [vmem:[%s203 + $0x18] sm:$0xff]
        %v239 = vld [vmem:[%s203 + $0x20] sm:$0xff]
        %v240 = vld [vmem:[%s203 + $0x28] sm:$0xff]
        %v241 = vld [vmem:[%s203 + $0x30] sm:$0xff]
        %v242 = vld [vmem:[%s203 + $0x38] sm:$0xff]
        %v243 = vld [vmem:[%s203 + $0x40] sm:$0xff]
        %v244 = vld [vmem:[%s203 + $0x48] sm:$0xff]
        %v245 = vld [vmem:[%s203 + $0x50] sm:$0xff]
        %v246 = vld [vmem:[%s203 + $0x58] sm:$0xff]
        %v247 = vld [vmem:[%s203 + $0x60] sm:$0xff]
        %v248 = vld [vmem:[%s203 + $0x68] sm:$0xff]
        %v249 = vld [vmem:[%s203 + $0x70] sm:$0xff]
        %v250 = vld [vmem:[%s203 + $0x78] sm:$0xff]
        %v251 = vld [vmem:[%s203 + $0x80] sm:$0xff]
        %v252 = vld [vmem:[%s203 + $0x88] sm:$0xff]
        %v253 = vld [vmem:[%s203 + $0x90] sm:$0xff]
        %v254 = vld [vmem:[%s203 + $0x98] sm:$0xff]
        %v255 = vld [vmem:[%s203 + $0xa0] sm:$0xff]
        %v256 = vld [vmem:[%s203 + $0xa8] sm:$0xff]
        %v257 = vld [vmem:[%s203 + $0xb0] sm:$0xff]
        %v258 = vld [vmem:[%s203 + $0xb8] sm:$0xff]
        %v259 = vld [vmem:[%s203 + $0xc0] sm:$0xff]
        %v260 = vld [vmem:[%s203 + $0xc8] sm:$0xff]
        %v261 = vld [vmem:[%s203 + $0xd0] sm:$0xff]
        %v262 = vld [vmem:[%s203 + $0xd8] sm:$0xff]
        %v263 = vld [vmem:[%s203 + $0xe0] sm:$0xff]
        %v264 = vld [vmem:[%s203 + $0xe8] sm:$0xff]
        %v265 = vld [vmem:[%s203 + $0xf0] sm:$0xff]
        %v266 = vld [vmem:[%s203 + $0xf8] sm:$0xff]
        %v267 = vld [vmem:[#allocation5] sm:$0xf]
        %v268 = vld [vmem:[#allocation5 + $0x4] sm:$0xf]
        %v269 = vld [vmem:[#allocation5 + $0x8] sm:$0xf]
        %v270 = vld [vmem:[#allocation5 + $0xc] sm:$0xf]
        %v271 = vld [vmem:[#allocation5 + $0x10] sm:$0xf]
        %v272 = vld [vmem:[#allocation5 + $0x14] sm:$0xf]
        %v273 = vld [vmem:[#allocation5 + $0x18] sm:$0xf]
        %v274 = vld [vmem:[#allocation5 + $0x1c] sm:$0xf]
        %v275 = vld [vmem:[#allocation5 + $0x20] sm:$0xf]
        %v276 = vld [vmem:[#allocation5 + $0x24] sm:$0xf]
        %v277 = vld [vmem:[#allocation5 + $0x28] sm:$0xf]
        %v278 = vld [vmem:[#allocation5 + $0x2c] sm:$0xf]
        %v279 = vld [vmem:[#allocation5 + $0x30] sm:$0xf]
        %v280 = vld [vmem:[#allocation5 + $0x34] sm:$0xf]
        %v281 = vld [vmem:[#allocation5 + $0x38] sm:$0xf]
        %v282 = vld [vmem:[#allocation5 + $0x3c] sm:$0xf]
        %v283 = vld [vmem:[#allocation5 + $0x40] sm:$0xf]
        %v284 = vld [vmem:[#allocation5 + $0x44] sm:$0xf]
        %v285 = vld [vmem:[#allocation5 + $0x48] sm:$0xf]
        %v286 = vld [vmem:[#allocation5 + $0x4c] sm:$0xf]
        %v287 = vld [vmem:[#allocation5 + $0x50] sm:$0xf]
        %v288 = vld [vmem:[#allocation5 + $0x54] sm:$0xf]
        %v289 = vld [vmem:[#allocation5 + $0x58] sm:$0xf]
        %v290 = vld [vmem:[#allocation5 + $0x5c] sm:$0xf]
        %v291 = vld [vmem:[#allocation5 + $0x60] sm:$0xf]
        %v292 = vld [vmem:[#allocation5 + $0x64] sm:$0xf]
        %v293 = vld [vmem:[#allocation5 + $0x68] sm:$0xf]
        %v294 = vld [vmem:[#allocation5 + $0x6c] sm:$0xf]
        %v295 = vld [vmem:[#allocation5 + $0x70] sm:$0xf]
        %v296 = vld [vmem:[#allocation5 + $0x74] sm:$0xf]
        %v297 = vld [vmem:[#allocation5 + $0x78] sm:$0xf]
        %v298 = vld [vmem:[#allocation5 + $0x7c] sm:$0xf]
        %v331 = vunpack.c.l.b16 %v235
        %v332 = vunpack.c.h.b16 %v235
        %v333 = vunpack.c.l.b16 %v236
        %v334 = vunpack.c.h.b16 %v236
        %v335 = vunpack.c.l.b16 %v237
        %v336 = vunpack.c.h.b16 %v237
        %v337 = vunpack.c.l.b16 %v238
        %v338 = vunpack.c.h.b16 %v238
        %v339 = vunpack.c.l.b16 %v239
        %v340 = vunpack.c.h.b16 %v239
        %v341 = vunpack.c.l.b16 %v240
        %v342 = vunpack.c.h.b16 %v240
        %v343 = vunpack.c.l.b16 %v241
        %v344 = vunpack.c.h.b16 %v241
        %v345 = vunpack.c.l.b16 %v242
        %v346 = vunpack.c.h.b16 %v242
        %v347 = vunpack.c.l.b16 %v243
        %v348 = vunpack.c.h.b16 %v243
        %v349 = vunpack.c.l.b16 %v244
        %v350 = vunpack.c.h.b16 %v244
        %v351 = vunpack.c.l.b16 %v245
        %v352 = vunpack.c.h.b16 %v245
        %v353 = vunpack.c.l.b16 %v246
        %v354 = vunpack.c.h.b16 %v246
        %v355 = vunpack.c.l.b16 %v247
        %v356 = vunpack.c.h.b16 %v247
        %v357 = vunpack.c.l.b16 %v248
        %v358 = vunpack.c.h.b16 %v248
        %v359 = vunpack.c.l.b16 %v249
        %v360 = vunpack.c.h.b16 %v249
        %v361 = vunpack.c.l.b16 %v250
        %v362 = vunpack.c.h.b16 %v250
        %v363 = vunpack.c.l.b16 %v251
        %v364 = vunpack.c.h.b16 %v251
        %v365 = vunpack.c.l.b16 %v252
        %v366 = vunpack.c.h.b16 %v252
        %v367 = vunpack.c.l.b16 %v253
        %v368 = vunpack.c.h.b16 %v253
        %v369 = vunpack.c.l.b16 %v254
        %v370 = vunpack.c.h.b16 %v254
        %v371 = vunpack.c.l.b16 %v255
        %v372 = vunpack.c.h.b16 %v255
        %v373 = vunpack.c.l.b16 %v256
        %v374 = vunpack.c.h.b16 %v256
        %v375 = vunpack.c.l.b16 %v257
        %v376 = vunpack.c.h.b16 %v257
        %v377 = vunpack.c.l.b16 %v258
        %v378 = vunpack.c.h.b16 %v258
        %v379 = vunpack.c.l.b16 %v259
        %v380 = vunpack.c.h.b16 %v259
        %v381 = vunpack.c.l.b16 %v260
        %v382 = vunpack.c.h.b16 %v260
        %v383 = vunpack.c.l.b16 %v261
        %v384 = vunpack.c.h.b16 %v261
        %v385 = vunpack.c.l.b16 %v262
        %v386 = vunpack.c.h.b16 %v262
        %v387 = vunpack.c.l.b16 %v263
        %v388 = vunpack.c.h.b16 %v263
        %v389 = vunpack.c.l.b16 %v264
        %v390 = vunpack.c.h.b16 %v264
        %v391 = vunpack.c.l.b16 %v265
        %v392 = vunpack.c.h.b16 %v265
        %v393 = vunpack.c.l.b16 %v266
        %v394 = vunpack.c.h.b16 %v266
        %v395 = vpack.c.b16 %v333, %v331
        %v396 = vpack.c.b16 %v334, %v332
        %v397 = vpack.c.b16 %v337, %v335
        %v398 = vpack.c.b16 %v338, %v336
        %v399 = vpack.c.b16 %v341, %v339
        %v400 = vpack.c.b16 %v342, %v340
        %v401 = vpack.c.b16 %v345, %v343
        %v402 = vpack.c.b16 %v346, %v344
        %v403 = vpack.c.b16 %v349, %v347
        %v404 = vpack.c.b16 %v350, %v348
        %v405 = vpack.c.b16 %v353, %v351
        %v406 = vpack.c.b16 %v354, %v352
        %v407 = vpack.c.b16 %v357, %v355
        %v408 = vpack.c.b16 %v358, %v356
        %v409 = vpack.c.b16 %v361, %v359
        %v410 = vpack.c.b16 %v362, %v360
        %v411 = vpack.c.b16 %v365, %v363
        %v412 = vpack.c.b16 %v366, %v364
        %v413 = vpack.c.b16 %v369, %v367
        %v414 = vpack.c.b16 %v370, %v368
        %v415 = vpack.c.b16 %v373, %v371
        %v416 = vpack.c.b16 %v374, %v372
        %v417 = vpack.c.b16 %v377, %v375
        %v418 = vpack.c.b16 %v378, %v376
        %v419 = vpack.c.b16 %v381, %v379
        %v420 = vpack.c.b16 %v382, %v380
        %v421 = vpack.c.b16 %v385, %v383
        %v422 = vpack.c.b16 %v386, %v384
        %v423 = vpack.c.b16 %v389, %v387
        %v424 = vpack.c.b16 %v390, %v388
        %v425 = vpack.c.b16 %v393, %v391
        %v426 = vpack.c.b16 %v394, %v392
        %v491 = vunpack.c.l.b16 %v267
        %v492 = vunpack.c.l.b16 %v268
        %v493 = vunpack.c.l.b16 %v269
        %v494 = vunpack.c.l.b16 %v270
        %v495 = vunpack.c.l.b16 %v271
        %v496 = vunpack.c.l.b16 %v272
        %v497 = vunpack.c.l.b16 %v273
        %v498 = vunpack.c.l.b16 %v274
        %v499 = vunpack.c.l.b16 %v275
        %v500 = vunpack.c.l.b16 %v276
        %v501 = vunpack.c.l.b16 %v277
        %v502 = vunpack.c.l.b16 %v278
        %v503 = vunpack.c.l.b16 %v279
        %v504 = vunpack.c.l.b16 %v280
        %v505 = vunpack.c.l.b16 %v281
        %v506 = vunpack.c.l.b16 %v282
        %v507 = vunpack.c.l.b16 %v283
        %v508 = vunpack.c.l.b16 %v284
        %v509 = vunpack.c.l.b16 %v285
        %v510 = vunpack.c.l.b16 %v286
        %v511 = vunpack.c.l.b16 %v287
        %v512 = vunpack.c.l.b16 %v288
        %v513 = vunpack.c.l.b16 %v289
        %v514 = vunpack.c.l.b16 %v290
        %v515 = vunpack.c.l.b16 %v291
        %v516 = vunpack.c.l.b16 %v292
        %v517 = vunpack.c.l.b16 %v293
        %v518 = vunpack.c.l.b16 %v294
        %v519 = vunpack.c.l.b16 %v295
        %v520 = vunpack.c.l.b16 %v296
        %v521 = vunpack.c.l.b16 %v297
        %v522 = vunpack.c.l.b16 %v298
        %v523 = vpack.c.b16 %v492, %v491
        %v524 = vpack.c.b16 %v494, %v493
        %v525 = vpack.c.b16 %v496, %v495
        %v526 = vpack.c.b16 %v498, %v497
        %v527 = vpack.c.b16 %v500, %v499
        %v528 = vpack.c.b16 %v502, %v501
        %v529 = vpack.c.b16 %v504, %v503
        %v530 = vpack.c.b16 %v506, %v505
        %v531 = vpack.c.b16 %v508, %v507
        %v532 = vpack.c.b16 %v510, %v509
        %v533 = vpack.c.b16 %v512, %v511
        %v534 = vpack.c.b16 %v514, %v513
        %v535 = vpack.c.b16 %v516, %v515
        %v536 = vpack.c.b16 %v518, %v517
        %v537 = vpack.c.b16 %v520, %v519
        %v538 = vpack.c.b16 %v522, %v521
        %555 = vmatprep.subr.bf16.mxu0 0
        %556 = vmatpush1.bf16.msra.mxu0 %v523
        %557 = vmatprep.subr.bf16.mxu0 0
        %558 = vmatpush1.bf16.msra.mxu0 %v524
        %559 = vmatprep.subr.bf16.mxu0 0
        %560 = vmatpush1.bf16.msra.mxu0 %v525
        %561 = vmatprep.subr.bf16.mxu0 0
        %562 = vmatpush1.bf16.msra.mxu0 %v526
        %563 = vmatprep.subr.bf16.mxu0 0
        %564 = vmatpush1.bf16.msra.mxu0 %v527
        %565 = vmatprep.subr.bf16.mxu0 0
        %566 = vmatpush1.bf16.msra.mxu0 %v528
        %567 = vmatprep.subr.bf16.mxu0 0
        %568 = vmatpush1.bf16.msra.mxu0 %v529
        %569 = vmatprep.subr.bf16.mxu0 0
        %570 = vmatpush1.bf16.msra.mxu0 %v530
        %571 = vmatprep.subr.bf16.mxu0 0
        %572 = vmatpush1.bf16.msra.mxu0 %v531
        %573 = vmatprep.subr.bf16.mxu0 0
        %574 = vmatpush1.bf16.msra.mxu0 %v532
        %575 = vmatprep.subr.bf16.mxu0 0
        %576 = vmatpush1.bf16.msra.mxu0 %v533
        %577 = vmatprep.subr.bf16.mxu0 0
        %578 = vmatpush1.bf16.msra.mxu0 %v534
        %579 = vmatprep.subr.bf16.mxu0 0
        %580 = vmatpush1.bf16.msra.mxu0 %v535
        %581 = vmatprep.subr.bf16.mxu0 0
        %582 = vmatpush1.bf16.msra.mxu0 %v536
        %583 = vmatprep.subr.bf16.mxu0 0
        %584 = vmatpush1.bf16.msra.mxu0 %v537
        %585 = vmatprep.subr.bf16.mxu0 0
        %586 = vmatpush1.bf16.msra.mxu0 %v538
        %587 = vmatprep.mubr.bf16.mxu0 %v396
        %588 = vmatmul.mubr.bf16.gmra.mrb[0].mxu0 %v395
        %v589 = vpop.f32.mrb[0].mxu0
        %v590 = vadd.f32 0.0, %v589
        %v591 = vpop.f32.mrb[0].mxu0
        %v592 = vpop.f32.mrb[0].mxu0
        %v593 = vadd.f32 0.0, %v592
        %v594 = vpop.f32.mrb[0].mxu0
        %595 = vmatprep.mubr.bf16.mxu0 %v398
        %596 = vmatmul.mubr.bf16.gmra.mrb[0].mxu0 %v397
        %v597 = vpop.f32.mrb[0].mxu0
        %v598 = vadd.f32 0.0, %v597
        %v599 = vpop.f32.mrb[0].mxu0
        %v600 = vpop.f32.mrb[0].mxu0
        %v601 = vadd.f32 0.0, %v600
        %v602 = vpop.f32.mrb[0].mxu0
        %603 = vmatprep.mubr.bf16.mxu0 %v400
        %604 = vmatmul.mubr.bf16.gmra.mrb[0].mxu0 %v399
        %v605 = vpop.f32.mrb[0].mxu0
        %v606 = vadd.f32 0.0, %v605
        %v607 = vpop.f32.mrb[0].mxu0
        %v608 = vpop.f32.mrb[0].mxu0
        %v609 = vadd.f32 0.0, %v608
        %v610 = vpop.f32.mrb[0].mxu0
        %611 = vmatprep.mubr.bf16.mxu0 %v402
        %612 = vmatmul.mubr.bf16.gmra.mrb[0].mxu0 %v401
        %v613 = vpop.f32.mrb[0].mxu0
        %v614 = vadd.f32 0.0, %v613
        %v615 = vpop.f32.mrb[0].mxu0
        %v616 = vpop.f32.mrb[0].mxu0
        %v617 = vadd.f32 0.0, %v616
        %v618 = vpop.f32.mrb[0].mxu0
        %619 = vmatprep.mubr.bf16.mxu0 %v404
        %620 = vmatmul.mubr.bf16.gmra.mrb[0].mxu0 %v403
        %v621 = vpop.f32.mrb[0].mxu0
        %v622 = vadd.f32 0.0, %v621
        %v623 = vpop.f32.mrb[0].mxu0
        %v624 = vpop.f32.mrb[0].mxu0
        %v625 = vadd.f32 0.0, %v624
        %v626 = vpop.f32.mrb[0].mxu0
        %627 = vmatprep.mubr.bf16.mxu0 %v406
        %628 = vmatmul.mubr.bf16.gmra.mrb[0].mxu0 %v405
        %v629 = vpop.f32.mrb[0].mxu0
        %v630 = vadd.f32 0.0, %v629
        %v631 = vpop.f32.mrb[0].mxu0
        %v632 = vpop.f32.mrb[0].mxu0
        %v633 = vadd.f32 0.0, %v632
        %v634 = vpop.f32.mrb[0].mxu0
        %635 = vmatprep.mubr.bf16.mxu0 %v408
        %636 = vmatmul.mubr.bf16.gmra.mrb[0].mxu0 %v407
        %v637 = vpop.f32.mrb[0].mxu0
        %v638 = vadd.f32 0.0, %v637
        %v639 = vpop.f32.mrb[0].mxu0
        %v640 = vpop.f32.mrb[0].mxu0
        %v641 = vadd.f32 0.0, %v640
        %v642 = vpop.f32.mrb[0].mxu0
        %643 = vmatprep.mubr.bf16.mxu0 %v410
        %644 = vmatmul.mubr.bf16.gmra.mrb[0].mxu0 %v409
        %v645 = vpop.f32.mrb[0].mxu0
        %v646 = vadd.f32 0.0, %v645
        %v647 = vpop.f32.mrb[0].mxu0
        %v648 = vpop.f32.mrb[0].mxu0
        %v649 = vadd.f32 0.0, %v648
        %v650 = vpop.f32.mrb[0].mxu0
        %651 = vmatprep.mubr.bf16.mxu0 %v412
        %652 = vmatmul.mubr.bf16.gmra.mrb[0].mxu0 %v411
        %v653 = vpop.f32.mrb[0].mxu0
        %v654 = vadd.f32 0.0, %v653
        %v655 = vpop.f32.mrb[0].mxu0
        %v656 = vpop.f32.mrb[0].mxu0
        %v657 = vadd.f32 0.0, %v656
        %v658 = vpop.f32.mrb[0].mxu0
        %659 = vmatprep.mubr.bf16.mxu0 %v414
        %660 = vmatmul.mubr.bf16.gmra.mrb[0].mxu0 %v413
        %v661 = vpop.f32.mrb[0].mxu0
        %v662 = vadd.f32 0.0, %v661
        %v663 = vpop.f32.mrb[0].mxu0
        %v664 = vpop.f32.mrb[0].mxu0
        %v665 = vadd.f32 0.0, %v664
        %v666 = vpop.f32.mrb[0].mxu0
        %667 = vmatprep.mubr.bf16.mxu0 %v416
        %668 = vmatmul.mubr.bf16.gmra.mrb[0].mxu0 %v415
        %v669 = vpop.f32.mrb[0].mxu0
        %v670 = vadd.f32 0.0, %v669
        %v671 = vpop.f32.mrb[0].mxu0
        %v672 = vpop.f32.mrb[0].mxu0
        %v673 = vadd.f32 0.0, %v672
        %v674 = vpop.f32.mrb[0].mxu0
        %675 = vmatprep.mubr.bf16.mxu0 %v418
        %676 = vmatmul.mubr.bf16.gmra.mrb[0].mxu0 %v417
        %v677 = vpop.f32.mrb[0].mxu0
        %v678 = vadd.f32 0.0, %v677
        %v679 = vpop.f32.mrb[0].mxu0
        %v680 = vpop.f32.mrb[0].mxu0
        %v681 = vadd.f32 0.0, %v680
        %v682 = vpop.f32.mrb[0].mxu0
        %683 = vmatprep.mubr.bf16.mxu0 %v420
        %684 = vmatmul.mubr.bf16.gmra.mrb[0].mxu0 %v419
        %v685 = vpop.f32.mrb[0].mxu0
        %v686 = vadd.f32 0.0, %v685
        %v687 = vpop.f32.mrb[0].mxu0
        %v688 = vpop.f32.mrb[0].mxu0
        %v689 = vadd.f32 0.0, %v688
        %v690 = vpop.f32.mrb[0].mxu0
        %691 = vmatprep.mubr.bf16.mxu0 %v422
        %692 = vmatmul.mubr.bf16.gmra.mrb[0].mxu0 %v421
        %v693 = vpop.f32.mrb[0].mxu0
        %v694 = vadd.f32 0.0, %v693
        %v695 = vpop.f32.mrb[0].mxu0
        %v696 = vpop.f32.mrb[0].mxu0
        %v697 = vadd.f32 0.0, %v696
        %v698 = vpop.f32.mrb[0].mxu0
        %699 = vmatprep.mubr.bf16.mxu0 %v424
        %700 = vmatmul.mubr.bf16.gmra.mrb[0].mxu0 %v423
        %v701 = vpop.f32.mrb[0].mxu0
        %v702 = vadd.f32 0.0, %v701
        %v703 = vpop.f32.mrb[0].mxu0
        %v704 = vpop.f32.mrb[0].mxu0
        %v705 = vadd.f32 0.0, %v704
        %v706 = vpop.f32.mrb[0].mxu0
        %707 = vmatprep.mubr.bf16.mxu0 %v426
        %708 = vmatmul.mubr.bf16.gmra.mrb[0].mxu0 %v425
        %v709 = vpop.f32.mrb[0].mxu0
        %v710 = vadd.f32 0.0, %v709
        %v711 = vpop.f32.mrb[0].mxu0
        %v712 = vpop.f32.mrb[0].mxu0
        %v713 = vadd.f32 0.0, %v712
        %v714 = vpop.f32.mrb[0].mxu0
        %715 = vdwg.mxu0
        %v716 = vld [vmem:[%s2] sm:$0x1]
        %v718 = vlaneseq
        %v719 = vshrl.u32 %v718, 7
        %v720 = vsub.s32 0, %v719
        %v721 = vrot.slane %v716, %v720
        %v723 = vmul.f32 %v590, %v721
        %v724 = vmul.f32 %v593, %v721
        %v725 = vmul.f32 %v598, %v721
        %v726 = vmul.f32 %v601, %v721
        %v727 = vmul.f32 %v606, %v721
        %v728 = vmul.f32 %v609, %v721
        %v729 = vmul.f32 %v614, %v721
        %v730 = vmul.f32 %v617, %v721
        %v731 = vmul.f32 %v622, %v721
        %v732 = vmul.f32 %v625, %v721
        %v733 = vmul.f32 %v630, %v721
        %v734 = vmul.f32 %v633, %v721
        %v735 = vmul.f32 %v638, %v721
        %v736 = vmul.f32 %v641, %v721
        %v737 = vmul.f32 %v646, %v721
        %v738 = vmul.f32 %v649, %v721
        %v739 = vmul.f32 %v654, %v721
        %v740 = vmul.f32 %v657, %v721
        %v741 = vmul.f32 %v662, %v721
        %v742 = vmul.f32 %v665, %v721
        %v743 = vmul.f32 %v670, %v721
        %v744 = vmul.f32 %v673, %v721
        %v745 = vmul.f32 %v678, %v721
        %v746 = vmul.f32 %v681, %v721
        %v747 = vmul.f32 %v686, %v721
        %v748 = vmul.f32 %v689, %v721
        %v749 = vmul.f32 %v694, %v721
        %v750 = vmul.f32 %v697, %v721
        %v751 = vmul.f32 %v702, %v721
        %v752 = vmul.f32 %v705, %v721
        %v753 = vmul.f32 %v710, %v721
        %v754 = vmul.f32 %v713, %v721
        %v755 = vld [vmem:[%s3] sm:$0x1]
        %v757 = vlaneseq
        %v758 = vshrl.u32 %v757, 7
        %v759 = vsub.s32 0, %v758
        %v760 = vrot.slane %v755, %v759
        %v762 = vadd.f32 %v723, %v760
        %v763 = vadd.f32 %v724, %v760
        %v764 = vadd.f32 %v725, %v760
        %v765 = vadd.f32 %v726, %v760
        %v766 = vadd.f32 %v727, %v760
        %v767 = vadd.f32 %v728, %v760
        %v768 = vadd.f32 %v729, %v760
        %v769 = vadd.f32 %v730, %v760
        %v770 = vadd.f32 %v731, %v760
        %v771 = vadd.f32 %v732, %v760
        %v772 = vadd.f32 %v733, %v760
        %v773 = vadd.f32 %v734, %v760
        %v774 = vadd.f32 %v735, %v760
        %v775 = vadd.f32 %v736, %v760
        %v776 = vadd.f32 %v737, %v760
        %v777 = vadd.f32 %v738, %v760
        %v778 = vadd.f32 %v739, %v760
        %v779 = vadd.f32 %v740, %v760
        %v780 = vadd.f32 %v741, %v760
        %v781 = vadd.f32 %v742, %v760
        %v782 = vadd.f32 %v743, %v760
        %v783 = vadd.f32 %v744, %v760
        %v784 = vadd.f32 %v745, %v760
        %v785 = vadd.f32 %v746, %v760
        %v786 = vadd.f32 %v747, %v760
        %v787 = vadd.f32 %v748, %v760
        %v788 = vadd.f32 %v749, %v760
        %v789 = vadd.f32 %v750, %v760
        %v790 = vadd.f32 %v751, %v760
        %v791 = vadd.f32 %v752, %v760
        %v792 = vadd.f32 %v753, %v760
        %v793 = vadd.f32 %v754, %v760
        %v794 = vmax.f32 %v762, 0.0
        %v795 = vmax.f32 %v763, 0.0
        %v796 = vmax.f32 %v764, 0.0
        %v797 = vmax.f32 %v765, 0.0
        %v798 = vmax.f32 %v766, 0.0
        %v799 = vmax.f32 %v767, 0.0
        %v800 = vmax.f32 %v768, 0.0
        %v801 = vmax.f32 %v769, 0.0
        %v802 = vmax.f32 %v770, 0.0
        %v803 = vmax.f32 %v771, 0.0
        %v804 = vmax.f32 %v772, 0.0
        %v805 = vmax.f32 %v773, 0.0
        %v806 = vmax.f32 %v774, 0.0
        %v807 = vmax.f32 %v775, 0.0
        %v808 = vmax.f32 %v776, 0.0
        %v809 = vmax.f32 %v777, 0.0
        %v810 = vmax.f32 %v778, 0.0
        %v811 = vmax.f32 %v779, 0.0
        %v812 = vmax.f32 %v780, 0.0
        %v813 = vmax.f32 %v781, 0.0
        %v814 = vmax.f32 %v782, 0.0
        %v815 = vmax.f32 %v783, 0.0
        %v816 = vmax.f32 %v784, 0.0
        %v817 = vmax.f32 %v785, 0.0
        %v818 = vmax.f32 %v786, 0.0
        %v819 = vmax.f32 %v787, 0.0
        %v820 = vmax.f32 %v788, 0.0
        %v821 = vmax.f32 %v789, 0.0
        %v822 = vmax.f32 %v790, 0.0
        %v823 = vmax.f32 %v791, 0.0
        %v824 = vmax.f32 %v792, 0.0
        %v825 = vmax.f32 %v793, 0.0
        %826 = vst [vmem:[%s231] sm:$0xff] %v794
        %827 = vst [vmem:[%s231 + $0x8] sm:$0xff] %v795
        %828 = vst [vmem:[%s231 + $0x10] sm:$0xff] %v796
        %829 = vst [vmem:[%s231 + $0x18] sm:$0xff] %v797
        %830 = vst [vmem:[%s231 + $0x20] sm:$0xff] %v798
        %831 = vst [vmem:[%s231 + $0x28] sm:$0xff] %v799
        %832 = vst [vmem:[%s231 + $0x30] sm:$0xff] %v800
        %833 = vst [vmem:[%s231 + $0x38] sm:$0xff] %v801
        %834 = vst [vmem:[%s231 + $0x40] sm:$0xff] %v802
        %835 = vst [vmem:[%s231 + $0x48] sm:$0xff] %v803
        %836 = vst [vmem:[%s231 + $0x50] sm:$0xff] %v804
        %837 = vst [vmem:[%s231 + $0x58] sm:$0xff] %v805
        %838 = vst [vmem:[%s231 + $0x60] sm:$0xff] %v806
        %839 = vst [vmem:[%s231 + $0x68] sm:$0xff] %v807
        %840 = vst [vmem:[%s231 + $0x70] sm:$0xff] %v808
        %841 = vst [vmem:[%s231 + $0x78] sm:$0xff] %v809
        %842 = vst [vmem:[%s231 + $0x80] sm:$0xff] %v810
        %843 = vst [vmem:[%s231 + $0x88] sm:$0xff] %v811
        %844 = vst [vmem:[%s231 + $0x90] sm:$0xff] %v812
        %845 = vst [vmem:[%s231 + $0x98] sm:$0xff] %v813
        %846 = vst [vmem:[%s231 + $0xa0] sm:$0xff] %v814
        %847 = vst [vmem:[%s231 + $0xa8] sm:$0xff] %v815
        %848 = vst [vmem:[%s231 + $0xb0] sm:$0xff] %v816
        %849 = vst [vmem:[%s231 + $0xb8] sm:$0xff] %v817
        %850 = vst [vmem:[%s231 + $0xc0] sm:$0xff] %v818
        %851 = vst [vmem:[%s231 + $0xc8] sm:$0xff] %v819
        %852 = vst [vmem:[%s231 + $0xd0] sm:$0xff] %v820
        %853 = vst [vmem:[%s231 + $0xd8] sm:$0xff] %v821
        %854 = vst [vmem:[%s231 + $0xe0] sm:$0xff] %v822
        %855 = vst [vmem:[%s231 + $0xe8] sm:$0xff] %v823
        %856 = vst [vmem:[%s231 + $0xf0] sm:$0xff] %v824
        %857 = vst [vmem:[%s231 + $0xf8] sm:$0xff] %v825
        %s858 = sand.u32 %s119, 1
        %s859 = scalar_lea.sflag [#allocation4], %s858
        %s860 = sand.u32 %s119, 1
        %s861 = smul.addr %s860, 256
        %s862 = scalar_lea.vmem [#allocation7], %s861
        // Predicated region
        $region45: #{tpu_custom_call.1} parent=35 // pred_check
          %p863 = pneg %p129
        $region46: #{tpu_custom_call.1} parent=35 // pred_check_branch
          %865 = sbr.rel (%p863) target = $region48
        $region47: #{tpu_custom_call.1} parent=35 // pred_region
          %s866 = smul.u32 32, %s22
          %s868 = ssub.s32 4096, 4096
          %869 = vsyncadd %s859, %s868
          %s870 = smul.addr %s866, 128
          %s871 = scalar_lea.hbm %s4, %s870
          %s872 = sshll.u32 %s862, 4
          %s873 = int_to_ptr.vmem [resolvable:$true] %s872
          %878 = dma.vmem_to_hbm [thread:$0]  %s873, 4096, %s871, %s859, 128, 128, 8
        $region48: #{tpu_custom_call.1} parent=35 // pred_fallthru
          _
      $region36: #{tpu_custom_call.1} parent=5 // pred_fallthru
        _
      %p879 = scmp.le.s32.totalorder 2, %s17
      // Predicated region
      $region49: #{tpu_custom_call.1} parent=5 // pred_check
        %p880 = pneg %p879
      $region50: #{tpu_custom_call.1} parent=5 // pred_check_branch
        %882 = sbr.rel (%p880) target = $region52
      $region51: #{tpu_custom_call.1} parent=5 // pred_region
        %s883 = ssub.s32 %s17, 2
        // Predicated region
        $region53: #{tpu_custom_call.1} parent=51 // pred_check
          %p884 = pneg %p135
        $region54: #{tpu_custom_call.1} parent=51 // pred_check_branch
          %886 = sbr.rel (%p884) target = $region56
        $region55: #{tpu_custom_call.1} parent=51 // pred_region
          %s887 = sand.u32 %s120, 1
          %s888 = scalar_lea.sflag [#allocation4], %s887
          %s889 = sand.u32 %s120, 1
          %s890 = smul.addr %s889, 256
          %s891 = scalar_lea.vmem [#allocation7], %s890
          %892 = dma.done %s888, 4096
        $region56: #{tpu_custom_call.1} parent=51 // pred_fallthru
          _
      $region52: #{tpu_custom_call.1} parent=5 // pred_fallthru
        _
    $region6: #{tpu_custom_call.1} parent=1 // loop_footer
      %s21 = sadd.s32 1, %s17
    $region7: #{tpu_custom_call.1} parent=1 // loop_footer_branch
      %16 = sbr.rel target = $region3
    $region8: #{tpu_custom_call.1} parent=1 // loop_exit
      _
    %893 = vsyncpa [#allocation3], 1
    %s894 = scalar_lea.sflag [#allocation3], 1
    %895 = vsyncpa %s894, 1
    %896 = vsyncpa [#allocation6], 1
    %897 = vsyncpa [#allocation4], 1
    %s898 = scalar_lea.sflag [#allocation4], 1
    %899 = vsyncpa %s898, 1

</llo_original>
